<compile_context>
chip_gen: v6e
topology: v6e:2x2x1
jax: 0.10.0
libtpu: 0.0.40
codegen_flags: <defaults>
</compile_context>

<pallas_src>
import jax
import jax.numpy as jnp
from jax import lax
from jax.experimental import pallas as pl
from jax.experimental.pallas import tpu as pltpu

HIDDEN = 40


def _mlp_kernel(x_ref, w1_ref, b1_ref, w2_ref, b2_ref, w3_ref, b3_ref, o_ref):
    # Shapes seen by the kernel (batch on the lane axis):
    #   x_ref : (input_dim, TILE_B)  f32
    #   w1_ref: (HIDDEN, input_dim)  f32   (PyTorch (out, in) layout)
    #   b1_ref: (HIDDEN, 1)          f32
    #   w2_ref: (HIDDEN, HIDDEN)     bf16  (PyTorch (out, in) layout)
    #   b2_ref: (HIDDEN, 1)          f32
    #   w3_ref: (HIDDEN, out_dim)    f32   (transposed PyTorch layout)
    #   b3_ref: (out_dim, 1)         f32
    #   o_ref : (out_dim, TILE_B)    f32
    input_dim = x_ref.shape[0]
    out_dim = o_ref.shape[0]

    x_t = x_ref[...]

    # ---- Layer 1: degenerate K = input_dim contraction.
    if input_dim == 1:
        # (HIDDEN,1) * (1,TILE_B) broadcast multiply-add -> VPU only, no MXU push.
        h1 = w1_ref[...] * x_t + b1_ref[...]
    else:
        h1 = jnp.dot(w1_ref[...], x_t, preferred_element_type=jnp.float32) + b1_ref[...]
    h1 = jnp.maximum(h1, 0.0)

    # ---- Layer 2: the only real matmul (40x40) @ (40,TILE_B).
    # bf16 MXU operands, f32 accumulate; bias add / ReLU stay in f32.
    h2 = jnp.dot(w2_ref[...], h1.astype(jnp.bfloat16),
                 preferred_element_type=jnp.float32) + b2_ref[...]
    h2 = jnp.maximum(h2, 0.0)

    # ---- Layer 3: degenerate N = out_dim.
    if out_dim == 1:
        # VPU multiply + sublane (XLU) reduction -> lane-dense (1, TILE_B) row.
        out = jnp.sum(h2 * w3_ref[...], axis=0, keepdims=True) + b3_ref[...]
    else:
        out = lax.dot_general(w3_ref[...], h2, (((0,), (0,)), ((), ())),
                              preferred_element_type=jnp.float32) + b3_ref[...]

    o_ref[...] = out


def mlp_forward(x, params, *, tile_b=1024):
    """x: (B, input_dim) f32.  params in PyTorch layout:
       w1 (H, in), b1 (H,), w2 (H, H), b2 (H,), w3 (out, H), b3 (out,)."""
    B, input_dim = x.shape
    out_dim = params["w3"].shape[0]

    # Batch tile: multiple of 128 lanes, clamped so tiny test batches stay small.
    tile_b = max(128, min(int(tile_b), pl.cdiv(B, 128) * 128))
    b_pad = pl.cdiv(B, tile_b) * tile_b
    num_tiles = b_pad // tile_b

    # Lane-dense layout plumbing (wrapper only): batch -> lane axis, zero pad.
    x_t = jnp.zeros((input_dim, b_pad), jnp.float32).at[:, :B].set(x.T)

    w1 = params["w1"].astype(jnp.float32)                       # (H, in)
    b1 = params["b1"].reshape(HIDDEN, 1).astype(jnp.float32)    # (H, 1)
    w2 = params["w2"].astype(jnp.bfloat16)                      # (H, H) bf16 MXU operand
    b2 = params["b2"].reshape(HIDDEN, 1).astype(jnp.float32)    # (H, 1)
    w3 = params["w3"].T.astype(jnp.float32)                     # (H, out)
    b3 = params["b3"].reshape(out_dim, 1).astype(jnp.float32)   # (out, 1)

    const = lambda i: (0, 0)   # weights/biases: same block every step -> VMEM-resident
    tiled = lambda i: (0, i)   # x^T / out^T: tiled along the batch (lane) axis

    out_t = pl.pallas_call(
        _mlp_kernel,
        out_shape=jax.ShapeDtypeStruct((out_dim, b_pad), jnp.float32),
        grid=(num_tiles,),
        in_specs=[
            pl.BlockSpec((input_dim, tile_b), tiled),   # x^T
            pl.BlockSpec((HIDDEN, input_dim), const),   # w1
            pl.BlockSpec((HIDDEN, 1), const),           # b1
            pl.BlockSpec((HIDDEN, HIDDEN), const),      # w2 (bf16)
            pl.BlockSpec((HIDDEN, 1), const),           # b2
            pl.BlockSpec((HIDDEN, out_dim), const),     # w3^T
            pl.BlockSpec((out_dim, 1), const),          # b3
        ],
        out_specs=pl.BlockSpec((out_dim, tile_b), tiled),
        compiler_params=pltpu.CompilerParams(
            dimension_semantics=("parallel",),          # batch rows independent
        ),
    )(x_t, w1, b1, w2, b2, w3, b3)

    # Back to PyTorch layout: (B, out_dim).
    return out_t[:, :B].T


def init_params(key, input_dim=1, hidden=HIDDEN, output_dim=1):
    """Deterministic synthetic init (nn.Linear-style bounds), PyTorch (out, in) layout."""
    ks = jax.random.split(key, 6)

    def linear(kw, kb, fan_in, fan_out):
        bound = 1.0 / jnp.sqrt(jnp.float32(fan_in))
        w = jax.random.uniform(kw, (fan_out, fan_in), jnp.float32, -bound, bound)
        b = jax.random.uniform(kb, (fan_out,), jnp.float32, -bound, bound)
        return w, b

    w1, b1 = linear(ks[0], ks[1], input_dim, hidden)
    w2, b2 = linear(ks[2], ks[3], hidden, hidden)
    w3, b3 = linear(ks[4], ks[5], hidden, output_dim)
    return {"w1": w1, "b1": b1, "w2": w2, "b2": b2, "w3": w3, "b3": b3}


def mlp_ref_f32(x, p):
    h = jnp.maximum(x @ p["w1"].T + p["b1"], 0.0)
    h = jnp.maximum(h @ p["w2"].T + p["b2"], 0.0)
    return h @ p["w3"].T + p["b3"]


def mlp_ref_bf16_mxu(x, p):
    # Matches the kernel's bf16-operand / f32-accumulate middle matmul.
    h = jnp.maximum(x @ p["w1"].T + p["b1"], 0.0)
    h = jnp.maximum(
        jnp.dot(h.astype(jnp.bfloat16), p["w2"].T.astype(jnp.bfloat16),
                preferred_element_type=jnp.float32) + p["b2"], 0.0)
    return h @ p["w3"].T + p["b3"]


if __name__ == "__main__":
    key = jax.random.PRNGKey(0)
    k_params, k_x = jax.random.split(key)

    input_dim, output_dim, batch = 1, 1, 8
    params = init_params(k_params, input_dim=input_dim, output_dim=output_dim)
    x = jax.random.normal(k_x, (batch, input_dim), dtype=jnp.float32)

    out = jax.block_until_ready(mlp_forward(x, params))
    assert out.shape == (batch, output_dim)

    # Tight check vs a reference that matches the kernel's bf16 MXU inputs,
    # plus a looser check vs the pure-f32 reference (bf16 rounding ~0.4% rel).
    ref_matched = mlp_ref_bf16_mxu(x, params)
    ref_f32 = mlp_ref_f32(x, params)
    assert jnp.allclose(out, ref_matched, atol=1e-4, rtol=1e-4), "mismatch vs bf16-matched ref"
    assert jnp.allclose(out, ref_f32, atol=2e-2, rtol=2e-2), "mismatch vs f32 ref"

    print("KERNEL_OK")
</pallas_src>

<mosaic_0001>
module attributes {stable_mosaic.version = 11 : i64} {
  func.func @_mlp_kernel(%arg0: i32, %arg1: memref<1x128xf32, #tpu.memory_space<vmem>>, %arg2: memref<40x1xf32, #tpu.memory_space<vmem>>, %arg3: memref<40x1xf32, #tpu.memory_space<vmem>>, %arg4: memref<40x40xbf16, #tpu.memory_space<vmem>>, %arg5: memref<40x1xf32, #tpu.memory_space<vmem>>, %arg6: memref<40x1xf32, #tpu.memory_space<vmem>>, %arg7: memref<1x1xf32, #tpu.memory_space<vmem>>, %arg8: memref<1x128xf32, #tpu.memory_space<vmem>>) attributes {dimension_semantics = [#tpu.dimension_semantics<parallel>], iteration_bounds = array<i64: 1>, scalar_prefetch = 0 : i64, scratch_operands = 0 : i64, tpu.core_type = #tpu.core_type<tc>, window_params = [{transform_indices = @transform_0, window_bounds = array<i64: 1, 128>}, {pipeline_mode = #tpu.pipeline_mode<synchronous>, transform_indices = @transform_1, window_bounds = array<i64: 40, 1>}, {pipeline_mode = #tpu.pipeline_mode<synchronous>, transform_indices = @transform_2, window_bounds = array<i64: 40, 1>}, {pipeline_mode = #tpu.pipeline_mode<synchronous>, transform_indices = @transform_3, window_bounds = array<i64: 40, 40>}, {pipeline_mode = #tpu.pipeline_mode<synchronous>, transform_indices = @transform_4, window_bounds = array<i64: 40, 1>}, {pipeline_mode = #tpu.pipeline_mode<synchronous>, transform_indices = @transform_5, window_bounds = array<i64: 40, 1>}, {pipeline_mode = #tpu.pipeline_mode<synchronous>, transform_indices = @transform_6, window_bounds = array<i64: 1, 1>}, {transform_indices = @transform_7, window_bounds = array<i64: 1, 128>}]} {
    %c0 = arith.constant 0 : index
    %c0_0 = arith.constant 0 : index
    %0 = vector.load %arg1[%c0, %c0_0] : memref<1x128xf32, #tpu.memory_space<vmem>>, vector<1x128xf32>
    %c0_1 = arith.constant 0 : index
    %c0_2 = arith.constant 0 : index
    %1 = vector.load %arg2[%c0_1, %c0_2] : memref<40x1xf32, #tpu.memory_space<vmem>>, vector<40x1xf32>
    %2 = vector.broadcast %1 : vector<40x1xf32> to vector<40x128xf32>
    %3 = vector.broadcast %0 : vector<1x128xf32> to vector<40x128xf32>
    %4 = arith.mulf %2, %3 : vector<40x128xf32>
    %c0_3 = arith.constant 0 : index
    %c0_4 = arith.constant 0 : index
    %5 = vector.load %arg3[%c0_3, %c0_4] : memref<40x1xf32, #tpu.memory_space<vmem>>, vector<40x1xf32>
    %6 = vector.broadcast %5 : vector<40x1xf32> to vector<40x128xf32>
    %7 = arith.addf %4, %6 : vector<40x128xf32>
    %cst = arith.constant 0.000000e+00 : f32
    %8 = vector.broadcast %cst : f32 to vector<40x128xf32>
    %9 = arith.maximumf %7, %8 : vector<40x128xf32>
    %c0_5 = arith.constant 0 : index
    %c0_6 = arith.constant 0 : index
    %10 = vector.load %arg4[%c0_5, %c0_6] : memref<40x40xbf16, #tpu.memory_space<vmem>>, vector<40x40xbf16>
    %11 = arith.truncf %9 : vector<40x128xf32> to vector<40x128xbf16>
    %cst_7 = arith.constant dense<0.000000e+00> : vector<40x128xf32>
    %12 = tpu.matmul %10, %11, %cst_7 {dimension_numbers = #tpu.dot_dimension_numbers<[1], [0], [0], [1], [0, 0, 1, 1], [], []>} : vector<40x40xbf16>, vector<40x128xbf16>, vector<40x128xf32> -> vector<40x128xf32>
    %c0_8 = arith.constant 0 : index
    %c0_9 = arith.constant 0 : index
    %13 = vector.load %arg5[%c0_8, %c0_9] : memref<40x1xf32, #tpu.memory_space<vmem>>, vector<40x1xf32>
    %14 = vector.broadcast %13 : vector<40x1xf32> to vector<40x128xf32>
    %15 = arith.addf %12, %14 : vector<40x128xf32>
    %cst_10 = arith.constant 0.000000e+00 : f32
    %16 = vector.broadcast %cst_10 : f32 to vector<40x128xf32>
    %17 = arith.maximumf %15, %16 : vector<40x128xf32>
    %c0_11 = arith.constant 0 : index
    %c0_12 = arith.constant 0 : index
    %18 = vector.load %arg6[%c0_11, %c0_12] : memref<40x1xf32, #tpu.memory_space<vmem>>, vector<40x1xf32>
    %19 = vector.broadcast %18 : vector<40x1xf32> to vector<40x128xf32>
    %20 = arith.mulf %17, %19 : vector<40x128xf32>
    %cst_13 = arith.constant dense<0.000000e+00> : vector<128xf32>
    %21 = vector.multi_reduction <add>, %20, %cst_13 [0] : vector<40x128xf32> to vector<128xf32>
    %22 = vector.shape_cast %21 : vector<128xf32> to vector<1x128xf32>
    %c0_14 = arith.constant 0 : index
    %c0_15 = arith.constant 0 : index
    %23 = vector.load %arg7[%c0_14, %c0_15] : memref<1x1xf32, #tpu.memory_space<vmem>>, vector<1x1xf32>
    %24 = vector.broadcast %23 : vector<1x1xf32> to vector<1x128xf32>
    %25 = arith.addf %22, %24 : vector<1x128xf32>
    %c0_16 = arith.constant 0 : index
    %c0_17 = arith.constant 0 : index
    %26 = vector.load %arg8[%c0_16, %c0_17] : memref<1x128xf32, #tpu.memory_space<vmem>>, vector<1x128xf32>
    tpu.vector_store %arg8[%c0_16, %c0_17], %25 {strides = array<i32>} : memref<1x128xf32, #tpu.memory_space<vmem>>, vector<1x128xf32>,
    return
  }
  func.func @transform_0(%arg0: i32) -> (i32, i32) {
    %c0_i32 = arith.constant 0 : i32
    %c0_i32_0 = arith.constant 0 : i32
    return %c0_i32, %arg0 : i32, i32
  }
  func.func @transform_1(%arg0: i32) -> (i32, i32) {
    %c0_i32 = arith.constant 0 : i32
    %c0_i32_0 = arith.constant 0 : i32
    %c0_i32_1 = arith.constant 0 : i32
    return %c0_i32, %c0_i32_0 : i32, i32
  }
  func.func @transform_2(%arg0: i32) -> (i32, i32) {
    %c0_i32 = arith.constant 0 : i32
    %c0_i32_0 = arith.constant 0 : i32
    %c0_i32_1 = arith.constant 0 : i32
    return %c0_i32, %c0_i32_0 : i32, i32
  }
  func.func @transform_3(%arg0: i32) -> (i32, i32) {
    %c0_i32 = arith.constant 0 : i32
    %c0_i32_0 = arith.constant 0 : i32
    %c0_i32_1 = arith.constant 0 : i32
    return %c0_i32, %c0_i32_0 : i32, i32
  }
  func.func @transform_4(%arg0: i32) -> (i32, i32) {
    %c0_i32 = arith.constant 0 : i32
    %c0_i32_0 = arith.constant 0 : i32
    %c0_i32_1 = arith.constant 0 : i32
    return %c0_i32, %c0_i32_0 : i32, i32
  }
  func.func @transform_5(%arg0: i32) -> (i32, i32) {
    %c0_i32 = arith.constant 0 : i32
    %c0_i32_0 = arith.constant 0 : i32
    %c0_i32_1 = arith.constant 0 : i32
    return %c0_i32, %c0_i32_0 : i32, i32
  }
  func.func @transform_6(%arg0: i32) -> (i32, i32) {
    %c0_i32 = arith.constant 0 : i32
    %c0_i32_0 = arith.constant 0 : i32
    %c0_i32_1 = arith.constant 0 : i32
    return %c0_i32, %c0_i32_0 : i32, i32
  }
  func.func @transform_7(%arg0: i32) -> (i32, i32) {
    %c0_i32 = arith.constant 0 : i32
    %c0_i32_0 = arith.constant 0 : i32
    return %c0_i32, %arg0 : i32, i32
  }
}

</mosaic_0001>

<llo_original>
// kernel: tpu_custom_call.1
$region0: #{tpu_custom_call.1}
  #allocation0 [shape = 'u32[]', space=smem, size = 0x4, offset = 0x4, fixed_abs, tag = 'smem constant byte address 0x4 - core index']
  #allocation1 [shape = 'u32[144,128]{1,0:T(1,128)}', space=vmem, size = 0x12000, scoped, tag = 'internal scratch']
  #allocation2 [shape = 'f32[1,1]{1,0:T(1,128)S(1)}', space=vmem, size = 0x200, scoped, tag = 'scoped memory for tpu_custom_call.1']
  %s0 = inlined_call_operand.vmem [shape: f32[1,128], index: 0, kind: input, shape index: {}]
  %s1 = inlined_call_operand.vmem [shape: f32[40,1], index: 1, kind: input, shape index: {}]
  %s2 = inlined_call_operand.vmem [shape: f32[40,1], index: 2, kind: input, shape index: {}]
  %s3 = inlined_call_operand.vmem [shape: bf16[40,40], index: 3, kind: input, shape index: {}]
  %s4 = inlined_call_operand.vmem [shape: f32[40,1], index: 4, kind: input, shape index: {}]
  %s5 = inlined_call_operand.vmem [shape: f32[40,1], index: 5, kind: input, shape index: {}]
  %s6 = inlined_call_operand.<no memory space> [shape: f32[1,1], index: 6, kind: input, shape index: {}]
  %s7 = inlined_call_operand.hbm [shape: f32[1,128], index: 7, kind: output, shape index: {}]
  %s8 = sld [smem:[#allocation0]]
  $region38: #{tpu_custom_call.1} parent=0
    _
  %s10 = ssub.s32 1, %s8
  %s11 = scalar_select 0, %s10, %s8
  %v12 = vstv %s6
  %13 = vst [vmem:[#allocation2] sm:$0x1] %v12
  $region1: #{tpu_custom_call.1} parent=0
    #allocation3 [shape = 'u8[512]{0}', space=vmem, size = 0x400, scoped, tag = 'output window, operand 0, single buffered']
    #allocation4 [shape = 's32[1]{0}', space=sflag, size = 0x4, scoped, tag = 'scoped memory for tpu_custom_call.1']
    %14 = vsyncpa [#allocation4], 0
    // Predicated region
    $region2: #{tpu_custom_call.1} parent=1 // pred_check
      _
    $region3: #{tpu_custom_call.1} parent=1 // pred_check_branch
      %16 = sbr.rel (0) target = $region5
    $region4: #{tpu_custom_call.1} parent=1 // pred_region
      _
    $region5: #{tpu_custom_call.1} parent=1 // pred_fallthru
      _
    // Predicated region
    $region6: #{tpu_custom_call.1} parent=1 // pred_check
      _
    $region7: #{tpu_custom_call.1} parent=1 // pred_check_branch
      %18 = sbr.rel (0) target = $region9
    $region8: #{tpu_custom_call.1} parent=1 // pred_region
      _
    $region9: #{tpu_custom_call.1} parent=1 // pred_fallthru
      _
    // Predicated region
    $region10: #{tpu_custom_call.1} parent=1 // pred_check
      _
    $region11: #{tpu_custom_call.1} parent=1 // pred_check_branch
      %20 = sbr.rel (0) target = $region13
    $region12: #{tpu_custom_call.1} parent=1 // pred_region
      _
    $region13: #{tpu_custom_call.1} parent=1 // pred_fallthru
      _
    // Predicated region
    $region14: #{tpu_custom_call.1} parent=1 // pred_check
      _
    $region15: #{tpu_custom_call.1} parent=1 // pred_check_branch
      %22 = sbr.rel (0) target = $region17
    $region16: #{tpu_custom_call.1} parent=1 // pred_region
      _
    $region17: #{tpu_custom_call.1} parent=1 // pred_fallthru
      _
    // Predicated region
    $region18: #{tpu_custom_call.1} parent=1 // pred_check
      _
    $region19: #{tpu_custom_call.1} parent=1 // pred_check_branch
      %24 = sbr.rel (0) target = $region21
    $region20: #{tpu_custom_call.1} parent=1 // pred_region
      _
    $region21: #{tpu_custom_call.1} parent=1 // pred_fallthru
      _
    // Predicated region
    $region22: #{tpu_custom_call.1} parent=1 // pred_check
      _
    $region23: #{tpu_custom_call.1} parent=1 // pred_check_branch
      %26 = sbr.rel (0) target = $region25
    $region24: #{tpu_custom_call.1} parent=1 // pred_region
      _
    $region25: #{tpu_custom_call.1} parent=1 // pred_fallthru
      _
    // Predicated region
    $region26: #{tpu_custom_call.1} parent=1 // pred_check
      _
    $region27: #{tpu_custom_call.1} parent=1 // pred_check_branch
      %28 = sbr.rel (0) target = $region29
    $region28: #{tpu_custom_call.1} parent=1 // pred_region
      _
    $region29: #{tpu_custom_call.1} parent=1 // pred_fallthru
      _
    %v30 = vld [vmem:[%s0] sm:$0x1]
    %v31 = vld [vmem:[%s1] sm:$0xff]
    %v32 = vld [vmem:[%s1 + $0x8] sm:$0xff]
    %v33 = vld [vmem:[%s1 + $0x10] sm:$0xff]
    %v34 = vld [vmem:[%s1 + $0x18] sm:$0xff]
    %v35 = vld [vmem:[%s1 + $0x20] sm:$0xff]
    %37 = vset.pattern.permute.xlu0 0
    %38 = vperm.xlu0 %37, %v31
    %v39 = vpop.permute.xlu0 %38
    %42 = vset.pattern.permute.xlu0 0
    %43 = vperm.xlu0 %42, %v32
    %v44 = vpop.permute.xlu0 %43
    %47 = vset.pattern.permute.xlu0 0
    %48 = vperm.xlu0 %47, %v33
    %v49 = vpop.permute.xlu0 %48
    %52 = vset.pattern.permute.xlu0 0
    %53 = vperm.xlu0 %52, %v34
    %v54 = vpop.permute.xlu0 %53
    %57 = vset.pattern.permute.xlu0 0
    %58 = vperm.xlu0 %57, %v35
    %v59 = vpop.permute.xlu0 %58
    %v62 = vlaneseq
    %v63 = vshrl.u32 %v62, 7
    %v64 = vsub.s32 0, %v63
    %v65 = vrot.slane %v30, %v64
    %v67 = vmul.f32 %v39, %v65
    %v68 = vmul.f32 %v44, %v65
    %v69 = vmul.f32 %v49, %v65
    %v70 = vmul.f32 %v54, %v65
    %v71 = vmul.f32 %v59, %v65
    %v72 = vld [vmem:[%s2] sm:$0xff]
    %v73 = vld [vmem:[%s2 + $0x8] sm:$0xff]
    %v74 = vld [vmem:[%s2 + $0x10] sm:$0xff]
    %v75 = vld [vmem:[%s2 + $0x18] sm:$0xff]
    %v76 = vld [vmem:[%s2 + $0x20] sm:$0xff]
    %78 = vset.pattern.permute.xlu0 0
    %79 = vperm.xlu0 %78, %v72
    %v80 = vpop.permute.xlu0 %79
    %83 = vset.pattern.permute.xlu0 0
    %84 = vperm.xlu0 %83, %v73
    %v85 = vpop.permute.xlu0 %84
    %88 = vset.pattern.permute.xlu0 0
    %89 = vperm.xlu0 %88, %v74
    %v90 = vpop.permute.xlu0 %89
    %93 = vset.pattern.permute.xlu0 0
    %94 = vperm.xlu0 %93, %v75
    %v95 = vpop.permute.xlu0 %94
    %98 = vset.pattern.permute.xlu0 0
    %99 = vperm.xlu0 %98, %v76
    %v100 = vpop.permute.xlu0 %99
    %v102 = vadd.f32 %v67, %v80
    %v103 = vadd.f32 %v68, %v85
    %v104 = vadd.f32 %v69, %v90
    %v105 = vadd.f32 %v70, %v95
    %v106 = vadd.f32 %v71, %v100
    %v107 = vmax.f32 %v102, 0.0
    %v108 = vmax.f32 %v103, 0.0
    %v109 = vmax.f32 %v104, 0.0
    %v110 = vmax.f32 %v105, 0.0
    %v111 = vmax.f32 %v106, 0.0
    %v112 = vld [vmem:[%s3] sm:$0xf]
    %v113 = vld [vmem:[%s3 + $0x4] sm:$0xf]
    %v114 = vld [vmem:[%s3 + $0x8] sm:$0xf]
    %v115 = vld [vmem:[%s3 + $0xc] sm:$0xf]
    %v116 = vld [vmem:[%s3 + $0x10] sm:$0xf]
    %v117 = vpack.c.bf16 %v108, %v107
    %v118 = vpack.c.bf16 %v110, %v109
    %v119 = vpack.c.bf16 %v111, %v111
    %v120 = vld [vmem:[%s4] sm:$0xff]
    %v121 = vld [vmem:[%s4 + $0x8] sm:$0xff]
    %v122 = vld [vmem:[%s4 + $0x10] sm:$0xff]
    %v123 = vld [vmem:[%s4 + $0x18] sm:$0xff]
    %v124 = vld [vmem:[%s4 + $0x20] sm:$0xff]
    %126 = vset.pattern.permute.xlu0 0
    %127 = vperm.xlu0 %126, %v120
    %v128 = vpop.permute.xlu0 %127
    %131 = vset.pattern.permute.xlu0 0
    %132 = vperm.xlu0 %131, %v121
    %v133 = vpop.permute.xlu0 %132
    %136 = vset.pattern.permute.xlu0 0
    %137 = vperm.xlu0 %136, %v122
    %v138 = vpop.permute.xlu0 %137
    %141 = vset.pattern.permute.xlu0 0
    %142 = vperm.xlu0 %141, %v123
    %v143 = vpop.permute.xlu0 %142
    %146 = vset.pattern.permute.xlu0 0
    %147 = vperm.xlu0 %146, %v124
    %v148 = vpop.permute.xlu0 %147
    %v155 = vunpack.c.l.b16 %v112
    %v156 = vunpack.c.l.b16 %v113
    %v157 = vunpack.c.l.b16 %v114
    %v158 = vunpack.c.l.b16 %v115
    %v159 = vunpack.c.l.b16 %v116
    %v160 = vpack.c.b16 %v156, %v155
    %v161 = vpack.c.b16 %v158, %v157
    %v162 = vpack.c.b16 %v159, %v159
    %vm163 = vcmask 326656
    %v165 = vsel %vm163, %v160, 0
    %v168 = vsel %vm163, %v161, 0
    %v171 = vsel %vm163, %v162, 0
    %vm173 = vcmask 1043456
    %v175 = vsel %vm173, %v119, 0
    %177 = vmatprep.subr.bf16.mxu0 0
    %178 = vmatpush1.bf16.msra.mxu0 0
    %179 = vmatprep.subr.bf16.mxu0 0
    %180 = vmatpush1.bf16.msra.mxu0 0
    %181 = vmatprep.subr.bf16.mxu0 0
    %182 = vmatpush1.bf16.msra.mxu0 0
    %183 = vmatprep.subr.bf16.mxu0 0
    %184 = vmatpush1.bf16.msra.mxu0 0
    %185 = vmatprep.subr.bf16.mxu0 0
    %186 = vmatpush1.bf16.msra.mxu0 0
    %187 = vmatprep.subr.bf16.mxu0 0
    %188 = vmatpush1.bf16.msra.mxu0 %v175
    %189 = vmatprep.subr.bf16.mxu0 0
    %190 = vmatpush1.bf16.msra.mxu0 %v118
    %191 = vmatprep.subr.bf16.mxu0 0
    %192 = vmatpush1.bf16.msra.mxu0 %v117
    %193 = vmatprep.subr.bf16.mxu0 0
    %194 = vmatpush2.bf16.msra.mxu0 0
    %195 = vmatprep.subr.bf16.mxu0 0
    %196 = vmatpush2.bf16.msra.mxu0 0
    %197 = vmatprep.subr.bf16.mxu0 0
    %198 = vmatpush2.bf16.msra.mxu0 0
    %199 = vmatprep.subr.bf16.mxu0 0
    %200 = vmatpush2.bf16.msra.mxu0 0
    %201 = vmatprep.subr.bf16.mxu0 0
    %202 = vmatpush2.bf16.msra.mxu0 0
    %203 = vmatprep.subr.bf16.mxu0 0
    %204 = vmatpush2.bf16.msra.mxu0 0
    %205 = vmatprep.subr.bf16.mxu0 0
    %206 = vmatpush2.bf16.msra.mxu0 0
    %207 = vmatprep.subr.bf16.mxu0 0
    %208 = vmatpush2.bf16.msra.mxu0 0
    %209 = vmatprep.mubr.bf16.mxu0 0
    %210 = vmatmul.mubr.bf16.gmra.mxu0 %v165
    %v211 = vpop.f32.mrf.mxu0
    %v212 = vadd.f32 %v128, %v211
    %v213 = vpop.f32.mrf.mxu0
    %v214 = vpop.f32.mrf.mxu0
    %v215 = vadd.f32 %v133, %v214
    %v216 = vpop.f32.mrf.mxu0
    %217 = vmatprep.mubr.bf16.mxu0 0
    %218 = vmatmul.mubr.bf16.gmra.mxu0 %v168
    %v219 = vpop.f32.mrf.mxu0
    %v220 = vadd.f32 %v138, %v219
    %v221 = vpop.f32.mrf.mxu0
    %v222 = vpop.f32.mrf.mxu0
    %v223 = vadd.f32 %v143, %v222
    %v224 = vpop.f32.mrf.mxu0
    %225 = vmatprep.mubr.bf16.mxu0 0
    %226 = vmatmul.mubr.bf16.gmra.mxu0 %v171
    %v227 = vpop.f32.mrf.mxu0
    %v228 = vadd.f32 %v148, %v227
    %v229 = vpop.f32.mrf.mxu0
    %v230 = vpop.f32.mrf.mxu0
    %v231 = vpop.f32.mrf.mxu0
    %232 = vdwg.mxu0
    %v233 = vmax.f32 %v212, 0.0
    %v234 = vmax.f32 %v215, 0.0
    %v235 = vmax.f32 %v220, 0.0
    %v236 = vmax.f32 %v223, 0.0
    %v237 = vmax.f32 %v228, 0.0
    %v238 = vld [vmem:[%s5] sm:$0xff]
    %v239 = vld [vmem:[%s5 + $0x8] sm:$0xff]
    %v240 = vld [vmem:[%s5 + $0x10] sm:$0xff]
    %v241 = vld [vmem:[%s5 + $0x18] sm:$0xff]
    %v242 = vld [vmem:[%s5 + $0x20] sm:$0xff]
    %244 = vset.pattern.permute.xlu0 0
    %245 = vperm.xlu0 %244, %v238
    %v246 = vpop.permute.xlu0 %245
    %249 = vset.pattern.permute.xlu0 0
    %250 = vperm.xlu0 %249, %v239
    %v251 = vpop.permute.xlu0 %250
    %254 = vset.pattern.permute.xlu0 0
    %255 = vperm.xlu0 %254, %v240
    %v256 = vpop.permute.xlu0 %255
    %259 = vset.pattern.permute.xlu0 0
    %260 = vperm.xlu0 %259, %v241
    %v261 = vpop.permute.xlu0 %260
    %264 = vset.pattern.permute.xlu0 0
    %265 = vperm.xlu0 %264, %v242
    %v266 = vpop.permute.xlu0 %265
    %v268 = vmul.f32 %v233, %v246
    %v269 = vmul.f32 %v234, %v251
    %v270 = vmul.f32 %v235, %v256
    %v271 = vmul.f32 %v236, %v261
    %v272 = vmul.f32 %v237, %v266
    %v273 = vadd.f32 %v268, %v269
    %v274 = vadd.f32 %v273, %v270
    %v275 = vadd.f32 %v274, %v271
    %v276 = vadd.f32 %v275, %v272
    %v277 = vrot.slane %v276, 4
    %v278 = vadd.f32 %v276, %v277
    %v279 = vrot.slane %v278, 2
    %v280 = vadd.f32 %v278, %v279
    %v281 = vrot.slane %v280, 1
    %v282 = vadd.f32 %v280, %v281
    %v283 = vld [vmem:[#allocation2] sm:$0x1]
    %285 = vset.pattern.permute.xlu0 0
    %286 = vperm.xlu0 %285, %v283
    %v287 = vpop.permute.xlu0 %286
    %v289 = vlaneseq
    %v290 = vshrl.u32 %v289, 7
    %v291 = vsub.s32 0, %v290
    %v292 = vrot.slane %v287, %v291
    %v293 = vadd.f32 %v282, %v292
    %294 = vst [vmem:[#allocation3] sm:$0x1] %v293
    // Predicated region
    $region30: #{tpu_custom_call.1} parent=1 // pred_check
      _
    $region31: #{tpu_custom_call.1} parent=1 // pred_check_branch
      %296 = sbr.rel (0) target = $region33
    $region32: #{tpu_custom_call.1} parent=1 // pred_region
      %s298 = ssub.s32 16, 16
      %299 = vsyncadd [#allocation4], %s298
      %s301 = sshll.u32 [#allocation3], 4
      %s302 = int_to_ptr.vmem [resolvable:$true] %s301
      %304 = dma.vmem_to_hbm [thread:$0]  %s302, 16, %s7, [#allocation4]
    $region33: #{tpu_custom_call.1} parent=1 // pred_fallthru
      _
    // Predicated region
    $region34: #{tpu_custom_call.1} parent=1 // pred_check
      _
    $region35: #{tpu_custom_call.1} parent=1 // pred_check_branch
      %306 = sbr.rel (0) target = $region37
    $region36: #{tpu_custom_call.1} parent=1 // pred_region
      %307 = dma.done [#allocation4], 16
    $region37: #{tpu_custom_call.1} parent=1 // pred_fallthru
      _
    %308 = vsyncpa [#allocation4], 1

</llo_original>
